<compile_context>
chip_gen: v7x
topology: tpu7x:2x2x1
jax: 0.10.0
libtpu: 0.0.40
codegen_flags: <defaults>
</compile_context>

<pallas_src>
import functools

import jax
import jax.numpy as jnp
from jax.experimental import pallas as pl
from jax.experimental.pallas import tpu as pltpu


def _leaky_relu(x, slope=0.01):
    # For 0 < slope < 1, max(x, slope*x) == LeakyReLU(x): one vmul + one vmax.
    return jnp.maximum(x, slope * x)


def critic_kernel(s_ref, a_ref, w1s_ref, w1a_ref, b1_ref, w2_ref, b2_ref,
                  w3_ref, b3_ref, o_ref, *, dot_dtype):
    cast = lambda v: v.astype(dot_dtype)

    s = s_ref[...]                                        # (TB, s_size) f32
    a = a_ref[...]                                        # (TB, a_size) f32

    # fc1 on the split input (no host-side concat / extra HBM round trip):
    #   cat([s, a], 1) @ W1 == s @ W1[:s_size] + a @ W1[s_size:]
    h1 = (jnp.dot(cast(s), cast(w1s_ref[...]), preferred_element_type=jnp.float32)
          + jnp.dot(cast(a), cast(w1a_ref[...]), preferred_element_type=jnp.float32)
          + b1_ref[...])
    h1 = _leaky_relu(h1)                                  # (TB, H) f32

    # fc2
    h2 = jnp.dot(cast(h1), cast(w2_ref[...]),
                 preferred_element_type=jnp.float32) + b2_ref[...]
    h2 = _leaky_relu(h2)                                  # (TB, H) f32

    # fc3: out_features == 1 -> keep it off the MXU (an N=1 matmul wastes
    # nearly the whole array and adds a serial push/drain). VPU multiply +
    # row reduction, scalar bias from SMEM.
    h3 = jnp.sum(h2 * w3_ref[...], axis=-1, keepdims=True) + b3_ref[0, 0]
    o_ref[...] = _leaky_relu(h3).astype(o_ref.dtype)      # (TB, 1)


def critic_forward(state, action, params, *, tile_b=128, use_bf16=False):
    """state: (B, s_size) f32, action: (B, a_size) f32. Returns (B, 1) f32."""
    w1s, w1a, b1, w2, b2, w3_row, b3 = params
    B, s_size = state.shape
    a_size = action.shape[1]

    # Batch tile: multiple of 8 (or the whole batch if it is small).
    tb = B if B <= tile_b else tile_b
    grid = (pl.cdiv(B, tb),)

    # Weights/biases are tiny -> full-array blocks, resident across all steps.
    full = lambda arr: pl.BlockSpec(arr.shape, lambda i: (0,) * arr.ndim)

    kernel = functools.partial(
        critic_kernel, dot_dtype=jnp.bfloat16 if use_bf16 else jnp.float32)

    return pl.pallas_call(
        kernel,
        out_shape=jax.ShapeDtypeStruct((B, 1), jnp.float32),
        grid=grid,
        in_specs=[
            pl.BlockSpec((tb, s_size), lambda i: (i, 0)),        # state tile
            pl.BlockSpec((tb, a_size), lambda i: (i, 0)),        # action tile
            full(w1s), full(w1a), full(b1),
            full(w2), full(b2), full(w3_row),
            pl.BlockSpec(memory_space=pltpu.MemorySpace.SMEM),   # b3 (1,1) scalar
        ],
        out_specs=pl.BlockSpec((tb, 1), lambda i: (i, 0)),
        compiler_params=pltpu.CompilerParams(
            dimension_semantics=("parallel",)),
    )(state, action, w1s, w1a, b1, w2, b2, w3_row, b3)


def init_critic_params(key, s_size, h_size, no_of_action_types):
    """PyTorch-Linear-like uniform init, laid out for the kernel."""
    d_in = s_size + no_of_action_types
    k = jax.random.split(key, 6)

    def lin(kw, kb, fan_in, fan_out):
        bound = 1.0 / jnp.sqrt(fan_in)
        w = jax.random.uniform(kw, (fan_in, fan_out), jnp.float32, -bound, bound)
        b = jax.random.uniform(kb, (1, fan_out), jnp.float32, -bound, bound)
        return w, b

    w1, b1 = lin(k[0], k[1], d_in, h_size)
    w2, b2 = lin(k[2], k[3], h_size, h_size)
    w3, b3 = lin(k[4], k[5], h_size, 1)
    # Kernel layout: w1 split over the [state, action] concat, w3 stored as a
    # (1, H) row (fc3 is an in-kernel reduction), b3 as a (1, 1) SMEM scalar.
    return (w1[:s_size], w1[s_size:], b1, w2, b2, w3.T, b3)


def ref_forward(state, action, params):
    """Pure-JAX reference identical to the PyTorch module's get_q_value."""
    w1s, w1a, b1, w2, b2, w3_row, b3 = params
    lr = lambda v: jnp.where(v > 0, v, 0.01 * v)
    x = jnp.concatenate([state, action], axis=1)
    w1 = jnp.concatenate([w1s, w1a], axis=0)
    h = lr(x @ w1 + b1)
    h = lr(h @ w2 + b2)
    return lr(h @ w3_row.T + b3)


if __name__ == "__main__":
    # Shapes consistent with the module: state 24, action one-hot 8, hidden 32.
    batch = 256          # exercises the batch grid (two 128-row tiles)
    s_size = 24
    no_of_action_types = 8
    h_size = 32

    key = jax.random.PRNGKey(0)
    k_params, k_state, k_action = jax.random.split(key, 3)

    params = init_critic_params(k_params, s_size, h_size, no_of_action_types)
    state = jax.random.normal(k_state, (batch, s_size), jnp.float32)
    action = jax.random.normal(k_action, (batch, no_of_action_types), jnp.float32)

    # f32 path (exact vs. reference).
    out = critic_forward(state, action, params)
    jax.block_until_ready(out)

    expected = ref_forward(state, action, params)
    assert out.shape == (batch, 1)
    assert jnp.allclose(out, expected, atol=1e-5, rtol=1e-5)

    # bf16-into-MXU path (v6e/v7x fast path; still f32 accumulate + f32 VPU math).
    out_bf16 = critic_forward(state, action, params, use_bf16=True)
    jax.block_until_ready(out_bf16)
    assert jnp.allclose(out_bf16, expected, atol=5e-2, rtol=5e-2)

    print("KERNEL_OK")
</pallas_src>

<mosaic_0001>
module attributes {stable_mosaic.version = 11 : i64} {
  func.func @critic_kernel(%arg0: i32, %arg1: memref<128x24xf32, #tpu.memory_space<vmem>>, %arg2: memref<128x8xf32, #tpu.memory_space<vmem>>, %arg3: memref<24x32xf32, #tpu.memory_space<vmem>>, %arg4: memref<8x32xf32, #tpu.memory_space<vmem>>, %arg5: memref<1x32xf32, #tpu.memory_space<vmem>>, %arg6: memref<32x32xf32, #tpu.memory_space<vmem>>, %arg7: memref<1x32xf32, #tpu.memory_space<vmem>>, %arg8: memref<1x32xf32, #tpu.memory_space<vmem>>, %arg9: memref<1x1xf32, #tpu.memory_space<smem>>, %arg10: memref<128x1xf32, #tpu.memory_space<vmem>>) attributes {dimension_semantics = [#tpu.dimension_semantics<parallel>], iteration_bounds = array<i64: 2>, scalar_prefetch = 0 : i64, scratch_operands = 0 : i64, tpu.core_type = #tpu.core_type<tc>, window_params = [{transform_indices = @transform_0, window_bounds = array<i64: 128, 24>}, {transform_indices = @transform_1, window_bounds = array<i64: 128, 8>}, {pipeline_mode = #tpu.pipeline_mode<synchronous>, transform_indices = @transform_2, window_bounds = array<i64: 24, 32>}, {pipeline_mode = #tpu.pipeline_mode<synchronous>, transform_indices = @transform_3, window_bounds = array<i64: 8, 32>}, {pipeline_mode = #tpu.pipeline_mode<synchronous>, transform_indices = @transform_4, window_bounds = array<i64: 1, 32>}, {pipeline_mode = #tpu.pipeline_mode<synchronous>, transform_indices = @transform_5, window_bounds = array<i64: 32, 32>}, {pipeline_mode = #tpu.pipeline_mode<synchronous>, transform_indices = @transform_6, window_bounds = array<i64: 1, 32>}, {pipeline_mode = #tpu.pipeline_mode<synchronous>, transform_indices = @transform_7, window_bounds = array<i64: 1, 32>}, {transform_indices = @transform_8, window_bounds = array<i64: 1, 1>}, {transform_indices = @transform_9, window_bounds = array<i64: 128, 1>}]} {
    %c0 = arith.constant 0 : index
    %c0_0 = arith.constant 0 : index
    %0 = vector.load %arg1[%c0, %c0_0] : memref<128x24xf32, #tpu.memory_space<vmem>>, vector<128x24xf32>
    %c0_1 = arith.constant 0 : index
    %c0_2 = arith.constant 0 : index
    %1 = vector.load %arg2[%c0_1, %c0_2] : memref<128x8xf32, #tpu.memory_space<vmem>>, vector<128x8xf32>
    %c0_3 = arith.constant 0 : index
    %c0_4 = arith.constant 0 : index
    %2 = vector.load %arg3[%c0_3, %c0_4] : memref<24x32xf32, #tpu.memory_space<vmem>>, vector<24x32xf32>
    %cst = arith.constant dense<0.000000e+00> : vector<128x32xf32>
    %3 = tpu.matmul %0, %2, %cst {dimension_numbers = #tpu.dot_dimension_numbers<[1], [0], [0], [1], [0, 0, 1, 1], [], []>} : vector<128x24xf32>, vector<24x32xf32>, vector<128x32xf32> -> vector<128x32xf32>
    %c0_5 = arith.constant 0 : index
    %c0_6 = arith.constant 0 : index
    %4 = vector.load %arg4[%c0_5, %c0_6] : memref<8x32xf32, #tpu.memory_space<vmem>>, vector<8x32xf32>
    %cst_7 = arith.constant dense<0.000000e+00> : vector<128x32xf32>
    %5 = tpu.matmul %1, %4, %cst_7 {dimension_numbers = #tpu.dot_dimension_numbers<[1], [0], [0], [1], [0, 0, 1, 1], [], []>} : vector<128x8xf32>, vector<8x32xf32>, vector<128x32xf32> -> vector<128x32xf32>
    %6 = arith.addf %3, %5 : vector<128x32xf32>
    %c0_8 = arith.constant 0 : index
    %c0_9 = arith.constant 0 : index
    %7 = vector.load %arg5[%c0_8, %c0_9] : memref<1x32xf32, #tpu.memory_space<vmem>>, vector<1x32xf32>
    %8 = vector.broadcast %7 : vector<1x32xf32> to vector<128x32xf32>
    %9 = arith.addf %6, %8 : vector<128x32xf32>
    %cst_10 = arith.constant 0.00999999977 : f32
    %10 = vector.broadcast %cst_10 : f32 to vector<128x32xf32>
    %11 = arith.mulf %10, %9 : vector<128x32xf32>
    %12 = arith.maximumf %9, %11 : vector<128x32xf32>
    %c0_11 = arith.constant 0 : index
    %c0_12 = arith.constant 0 : index
    %13 = vector.load %arg6[%c0_11, %c0_12] : memref<32x32xf32, #tpu.memory_space<vmem>>, vector<32x32xf32>
    %cst_13 = arith.constant dense<0.000000e+00> : vector<128x32xf32>
    %14 = tpu.matmul %12, %13, %cst_13 {dimension_numbers = #tpu.dot_dimension_numbers<[1], [0], [0], [1], [0, 0, 1, 1], [], []>} : vector<128x32xf32>, vector<32x32xf32>, vector<128x32xf32> -> vector<128x32xf32>
    %c0_14 = arith.constant 0 : index
    %c0_15 = arith.constant 0 : index
    %15 = vector.load %arg7[%c0_14, %c0_15] : memref<1x32xf32, #tpu.memory_space<vmem>>, vector<1x32xf32>
    %16 = vector.broadcast %15 : vector<1x32xf32> to vector<128x32xf32>
    %17 = arith.addf %14, %16 : vector<128x32xf32>
    %cst_16 = arith.constant 0.00999999977 : f32
    %18 = vector.broadcast %cst_16 : f32 to vector<128x32xf32>
    %19 = arith.mulf %18, %17 : vector<128x32xf32>
    %20 = arith.maximumf %17, %19 : vector<128x32xf32>
    %c0_17 = arith.constant 0 : index
    %c0_18 = arith.constant 0 : index
    %21 = vector.load %arg8[%c0_17, %c0_18] : memref<1x32xf32, #tpu.memory_space<vmem>>, vector<1x32xf32>
    %22 = vector.broadcast %21 : vector<1x32xf32> to vector<128x32xf32>
    %23 = arith.mulf %20, %22 : vector<128x32xf32>
    %cst_19 = arith.constant dense<0.000000e+00> : vector<128xf32>
    %24 = vector.multi_reduction <add>, %23, %cst_19 [1] : vector<128x32xf32> to vector<128xf32>
    %25 = vector.shape_cast %24 : vector<128xf32> to vector<128x1xf32>
    %c0_20 = arith.constant 0 : index
    %c0_21 = arith.constant 0 : index
    %26 = memref.load %arg9[%c0_20, %c0_21] : memref<1x1xf32, #tpu.memory_space<smem>>
    %27 = vector.broadcast %26 : f32 to vector<128x1xf32>
    %28 = arith.addf %25, %27 : vector<128x1xf32>
    %cst_22 = arith.constant 0.00999999977 : f32
    %29 = vector.broadcast %cst_22 : f32 to vector<128x1xf32>
    %30 = arith.mulf %29, %28 : vector<128x1xf32>
    %31 = arith.maximumf %28, %30 : vector<128x1xf32>
    %c0_23 = arith.constant 0 : index
    %c0_24 = arith.constant 0 : index
    %32 = vector.load %arg10[%c0_23, %c0_24] : memref<128x1xf32, #tpu.memory_space<vmem>>, vector<128x1xf32>
    tpu.vector_store %arg10[%c0_23, %c0_24], %31 {strides = array<i32>} : memref<128x1xf32, #tpu.memory_space<vmem>>, vector<128x1xf32>,
    return
  }
  func.func @transform_0(%arg0: i32) -> (i32, i32) {
    %c0_i32 = arith.constant 0 : i32
    %c0_i32_0 = arith.constant 0 : i32
    return %arg0, %c0_i32 : i32, i32
  }
  func.func @transform_1(%arg0: i32) -> (i32, i32) {
    %c0_i32 = arith.constant 0 : i32
    %c0_i32_0 = arith.constant 0 : i32
    return %arg0, %c0_i32 : i32, i32
  }
  func.func @transform_2(%arg0: i32) -> (i32, i32) {
    %c0_i32 = arith.constant 0 : i32
    %c0_i32_0 = arith.constant 0 : i32
    %c0_i32_1 = arith.constant 0 : i32
    return %c0_i32, %c0_i32_0 : i32, i32
  }
  func.func @transform_3(%arg0: i32) -> (i32, i32) {
    %c0_i32 = arith.constant 0 : i32
    %c0_i32_0 = arith.constant 0 : i32
    %c0_i32_1 = arith.constant 0 : i32
    return %c0_i32, %c0_i32_0 : i32, i32
  }
  func.func @transform_4(%arg0: i32) -> (i32, i32) {
    %c0_i32 = arith.constant 0 : i32
    %c0_i32_0 = arith.constant 0 : i32
    %c0_i32_1 = arith.constant 0 : i32
    return %c0_i32, %c0_i32_0 : i32, i32
  }
  func.func @transform_5(%arg0: i32) -> (i32, i32) {
    %c0_i32 = arith.constant 0 : i32
    %c0_i32_0 = arith.constant 0 : i32
    %c0_i32_1 = arith.constant 0 : i32
    return %c0_i32, %c0_i32_0 : i32, i32
  }
  func.func @transform_6(%arg0: i32) -> (i32, i32) {
    %c0_i32 = arith.constant 0 : i32
    %c0_i32_0 = arith.constant 0 : i32
    %c0_i32_1 = arith.constant 0 : i32
    return %c0_i32, %c0_i32_0 : i32, i32
  }
  func.func @transform_7(%arg0: i32) -> (i32, i32) {
    %c0_i32 = arith.constant 0 : i32
    %c0_i32_0 = arith.constant 0 : i32
    %c0_i32_1 = arith.constant 0 : i32
    return %c0_i32, %c0_i32_0 : i32, i32
  }
  func.func @transform_8(%arg0: i32) -> (i32, i32) {
    %c0_i32 = arith.constant 0 : i32
    %c0_i32_0 = arith.constant 0 : i32
    %c0_i32_1 = arith.constant 0 : i32
    return %c0_i32, %c0_i32_0 : i32, i32
  }
  func.func @transform_9(%arg0: i32) -> (i32, i32) {
    %c0_i32 = arith.constant 0 : i32
    %c0_i32_0 = arith.constant 0 : i32
    return %arg0, %c0_i32 : i32, i32
  }
}

</mosaic_0001>

<llo_original>
// kernel: tpu_custom_call.1
$region0: #{tpu_custom_call.1}
  #allocation0 [shape = 'u32[]', space=smem, size = 0x4, offset = 0x4, fixed_abs, tag = 'smem constant byte address 0x4 - core index']
  #allocation1 [shape = 'u32[144,128]{1,0:T(1,128)}', space=vmem, size = 0x12000, scoped, tag = 'internal scratch']
  #allocation2 [shape = 'f32[1,1]{1,0:T(1,128)S(6)}', space=smem, size = 0x200, scoped, tag = 'scoped memory for tpu_custom_call.1']
  %s0 = inlined_call_operand.vmem [shape: f32[256,24], index: 0, kind: input, shape index: {}]
  %s1 = inlined_call_operand.vmem [shape: f32[256,8], index: 1, kind: input, shape index: {}]
  %s2 = inlined_call_operand.vmem [shape: f32[24,32], index: 2, kind: input, shape index: {}]
  %s3 = inlined_call_operand.vmem [shape: f32[8,32], index: 3, kind: input, shape index: {}]
  %s4 = inlined_call_operand.vmem [shape: f32[1,32], index: 4, kind: input, shape index: {}]
  %s5 = inlined_call_operand.vmem [shape: f32[32,32], index: 5, kind: input, shape index: {}]
  %s6 = inlined_call_operand.vmem [shape: f32[1,32], index: 6, kind: input, shape index: {}]
  %s7 = inlined_call_operand.vmem [shape: f32[1,32], index: 7, kind: input, shape index: {}]
  %s8 = inlined_call_operand.<no memory space> [shape: f32[1,1], index: 8, kind: input, shape index: {}]
  %s9 = inlined_call_operand.vmem [shape: f32[256,1], index: 9, kind: output, shape index: {}]
  %s10 = sld [smem:[#allocation0]]
  $region69: #{tpu_custom_call.1} parent=0
    _
  %s12 = ssub.s32 1, %s10
  %s13 = scalar_select 0, %s12, %s10
  %14 = sst [smem:[#allocation2]] %s8
  loop: start=0, step=1, limit=4
  $region2: #{tpu_custom_call.1} parent=0 // loop_pre_header
    _
  $region3: #{tpu_custom_call.1} parent=0 // loop_header
    %s16 = sphi 0, %s20
    %p17 = scmp.ge.s32.totalorder %s16, 4
    %s26 = sphi 0, %s28
    %s29 = sphi 0, %s26
    %s30 = sphi 0, %s29
    %s46 = sphi 0, %s30
    %s52 = sphi 0, %s54
    %s55 = sphi 0, %s52
    %s56 = sphi 0, %s55
    %s72 = sphi 0, %s56
    %s76 = sphi 0, %s76
    %s78 = sphi 0, %s76
    %s79 = sphi 0, %s78
    %s93 = sphi 0, %s79
    %s97 = sphi 0, %s97
    %s99 = sphi 0, %s97
    %s100 = sphi 0, %s99
    %s114 = sphi 0, %s100
    %s118 = sphi 0, %s118
    %s120 = sphi 0, %s118
    %s121 = sphi 0, %s120
    %s135 = sphi 0, %s121
    %s139 = sphi 0, %s139
    %s141 = sphi 0, %s139
    %s142 = sphi 0, %s141
    %s156 = sphi 0, %s142
    %s160 = sphi 0, %s160
    %s162 = sphi 0, %s160
    %s163 = sphi 0, %s162
    %s177 = sphi 0, %s163
    %s181 = sphi 0, %s181
    %s183 = sphi 0, %s181
    %s184 = sphi 0, %s183
    %s198 = sphi 0, %s184
    %s202 = sphi 0, %s202
    %s204 = sphi 0, %s202
    %s205 = sphi 0, %s204
    %s219 = sphi 0, %s205
    %s225 = sphi 0, %s227
    %s228 = sphi 0, %s225
    %s229 = sphi 0, %s228
    %s245 = sphi 0, %s229
  $region4: #{tpu_custom_call.1} parent=0 // loop_header_branch
    %19 = sbr.rel (%p17) target = $region8
  $region5: #{tpu_custom_call.1} parent=0 // loop_body
    %s21 = ssub.s32 %s16, 1
    %s22 = ssub.s32 %s16, 2
    %s23 = sadd.s32 %s16, 1
    %s24 = ssub.s32 %s16, %s23
    %p25 = scmp.eq.s32.totalorder %s24, 0
    %s27 = sadd.s32 %s26, 1
    %s28 = scalar_select %p25, %s26, %s27
    %p31 = pneg %p25
    %p32 = scmp.eq.s32.totalorder %s16, 1
    %p33 = por %p31, %p32
    %p34 = scmp.ne.s32.totalorder %s26, %s29
    %p35 = scmp.eq.s32.totalorder %s16, 0
    %p36 = por %p34, %p35
    %p37 = scmp.ne.s32.totalorder %s26, %s29
    %p38 = scmp.eq.s32.totalorder %s21, 1
    %p39 = por %p37, %p38
    %p40 = scmp.ne.s32.totalorder %s29, %s30
    %p41 = scmp.eq.s32.totalorder %s21, 0
    %p42 = por %p40, %p41
    %p43 = scmp.ne.s32.totalorder %s29, %s30
    %p44 = scmp.eq.s32.totalorder %s22, 1
    %p45 = por %p43, %p44
    %p47 = scmp.ne.s32.totalorder %s30, %s46
    %p48 = scmp.eq.s32.totalorder %s22, 0
    %p49 = por %p47, %p48
    %s50 = ssub.s32 %s16, %s23
    %p51 = scmp.eq.s32.totalorder %s50, 0
    %s53 = sadd.s32 %s52, 1
    %s54 = scalar_select %p51, %s52, %s53
    %p57 = pneg %p51
    %p58 = scmp.eq.s32.totalorder %s16, 1
    %p59 = por %p57, %p58
    %p60 = scmp.ne.s32.totalorder %s52, %s55
    %p61 = scmp.eq.s32.totalorder %s16, 0
    %p62 = por %p60, %p61
    %p63 = scmp.ne.s32.totalorder %s52, %s55
    %p64 = scmp.eq.s32.totalorder %s21, 1
    %p65 = por %p63, %p64
    %p66 = scmp.ne.s32.totalorder %s55, %s56
    %p67 = scmp.eq.s32.totalorder %s21, 0
    %p68 = por %p66, %p67
    %p69 = scmp.ne.s32.totalorder %s55, %s56
    %p70 = scmp.eq.s32.totalorder %s22, 1
    %p71 = por %p69, %p70
    %p73 = scmp.ne.s32.totalorder %s56, %s72
    %p74 = scmp.eq.s32.totalorder %s22, 0
    %p75 = por %p73, %p74
    %s77 = sadd.s32 %s76, 1
    %p80 = scmp.eq.s32.totalorder %s16, 1
    %p81 = scmp.ne.s32.totalorder %s76, %s78
    %p82 = scmp.eq.s32.totalorder %s16, 0
    %p83 = por %p81, %p82
    %p84 = scmp.ne.s32.totalorder %s76, %s78
    %p85 = scmp.eq.s32.totalorder %s21, 1
    %p86 = por %p84, %p85
    %p87 = scmp.ne.s32.totalorder %s78, %s79
    %p88 = scmp.eq.s32.totalorder %s21, 0
    %p89 = por %p87, %p88
    %p90 = scmp.ne.s32.totalorder %s78, %s79
    %p91 = scmp.eq.s32.totalorder %s22, 1
    %p92 = por %p90, %p91
    %p94 = scmp.ne.s32.totalorder %s79, %s93
    %p95 = scmp.eq.s32.totalorder %s22, 0
    %p96 = por %p94, %p95
    %s98 = sadd.s32 %s97, 1
    %p101 = scmp.eq.s32.totalorder %s16, 1
    %p102 = scmp.ne.s32.totalorder %s97, %s99
    %p103 = scmp.eq.s32.totalorder %s16, 0
    %p104 = por %p102, %p103
    %p105 = scmp.ne.s32.totalorder %s97, %s99
    %p106 = scmp.eq.s32.totalorder %s21, 1
    %p107 = por %p105, %p106
    %p108 = scmp.ne.s32.totalorder %s99, %s100
    %p109 = scmp.eq.s32.totalorder %s21, 0
    %p110 = por %p108, %p109
    %p111 = scmp.ne.s32.totalorder %s99, %s100
    %p112 = scmp.eq.s32.totalorder %s22, 1
    %p113 = por %p111, %p112
    %p115 = scmp.ne.s32.totalorder %s100, %s114
    %p116 = scmp.eq.s32.totalorder %s22, 0
    %p117 = por %p115, %p116
    %s119 = sadd.s32 %s118, 1
    %p122 = scmp.eq.s32.totalorder %s16, 1
    %p123 = scmp.ne.s32.totalorder %s118, %s120
    %p124 = scmp.eq.s32.totalorder %s16, 0
    %p125 = por %p123, %p124
    %p126 = scmp.ne.s32.totalorder %s118, %s120
    %p127 = scmp.eq.s32.totalorder %s21, 1
    %p128 = por %p126, %p127
    %p129 = scmp.ne.s32.totalorder %s120, %s121
    %p130 = scmp.eq.s32.totalorder %s21, 0
    %p131 = por %p129, %p130
    %p132 = scmp.ne.s32.totalorder %s120, %s121
    %p133 = scmp.eq.s32.totalorder %s22, 1
    %p134 = por %p132, %p133
    %p136 = scmp.ne.s32.totalorder %s121, %s135
    %p137 = scmp.eq.s32.totalorder %s22, 0
    %p138 = por %p136, %p137
    %s140 = sadd.s32 %s139, 1
    %p143 = scmp.eq.s32.totalorder %s16, 1
    %p144 = scmp.ne.s32.totalorder %s139, %s141
    %p145 = scmp.eq.s32.totalorder %s16, 0
    %p146 = por %p144, %p145
    %p147 = scmp.ne.s32.totalorder %s139, %s141
    %p148 = scmp.eq.s32.totalorder %s21, 1
    %p149 = por %p147, %p148
    %p150 = scmp.ne.s32.totalorder %s141, %s142
    %p151 = scmp.eq.s32.totalorder %s21, 0
    %p152 = por %p150, %p151
    %p153 = scmp.ne.s32.totalorder %s141, %s142
    %p154 = scmp.eq.s32.totalorder %s22, 1
    %p155 = por %p153, %p154
    %p157 = scmp.ne.s32.totalorder %s142, %s156
    %p158 = scmp.eq.s32.totalorder %s22, 0
    %p159 = por %p157, %p158
    %s161 = sadd.s32 %s160, 1
    %p164 = scmp.eq.s32.totalorder %s16, 1
    %p165 = scmp.ne.s32.totalorder %s160, %s162
    %p166 = scmp.eq.s32.totalorder %s16, 0
    %p167 = por %p165, %p166
    %p168 = scmp.ne.s32.totalorder %s160, %s162
    %p169 = scmp.eq.s32.totalorder %s21, 1
    %p170 = por %p168, %p169
    %p171 = scmp.ne.s32.totalorder %s162, %s163
    %p172 = scmp.eq.s32.totalorder %s21, 0
    %p173 = por %p171, %p172
    %p174 = scmp.ne.s32.totalorder %s162, %s163
    %p175 = scmp.eq.s32.totalorder %s22, 1
    %p176 = por %p174, %p175
    %p178 = scmp.ne.s32.totalorder %s163, %s177
    %p179 = scmp.eq.s32.totalorder %s22, 0
    %p180 = por %p178, %p179
    %s182 = sadd.s32 %s181, 1
    %p185 = scmp.eq.s32.totalorder %s16, 1
    %p186 = scmp.ne.s32.totalorder %s181, %s183
    %p187 = scmp.eq.s32.totalorder %s16, 0
    %p188 = por %p186, %p187
    %p189 = scmp.ne.s32.totalorder %s181, %s183
    %p190 = scmp.eq.s32.totalorder %s21, 1
    %p191 = por %p189, %p190
    %p192 = scmp.ne.s32.totalorder %s183, %s184
    %p193 = scmp.eq.s32.totalorder %s21, 0
    %p194 = por %p192, %p193
    %p195 = scmp.ne.s32.totalorder %s183, %s184
    %p196 = scmp.eq.s32.totalorder %s22, 1
    %p197 = por %p195, %p196
    %p199 = scmp.ne.s32.totalorder %s184, %s198
    %p200 = scmp.eq.s32.totalorder %s22, 0
    %p201 = por %p199, %p200
    %s203 = sadd.s32 %s202, 1
    %p206 = scmp.eq.s32.totalorder %s16, 1
    %p207 = scmp.ne.s32.totalorder %s202, %s204
    %p208 = scmp.eq.s32.totalorder %s16, 0
    %p209 = por %p207, %p208
    %p210 = scmp.ne.s32.totalorder %s202, %s204
    %p211 = scmp.eq.s32.totalorder %s21, 1
    %p212 = por %p210, %p211
    %p213 = scmp.ne.s32.totalorder %s204, %s205
    %p214 = scmp.eq.s32.totalorder %s21, 0
    %p215 = por %p213, %p214
    %p216 = scmp.ne.s32.totalorder %s204, %s205
    %p217 = scmp.eq.s32.totalorder %s22, 1
    %p218 = por %p216, %p217
    %p220 = scmp.ne.s32.totalorder %s205, %s219
    %p221 = scmp.eq.s32.totalorder %s22, 0
    %p222 = por %p220, %p221
    %s223 = ssub.s32 %s16, %s23
    %p224 = scmp.eq.s32.totalorder %s223, 0
    %s226 = sadd.s32 %s225, 1
    %s227 = scalar_select %p224, %s225, %s226
    %p230 = pneg %p224
    %p231 = scmp.eq.s32.totalorder %s16, 1
    %p232 = por %p230, %p231
    %p233 = scmp.ne.s32.totalorder %s225, %s228
    %p234 = scmp.eq.s32.totalorder %s16, 0
    %p235 = por %p233, %p234
    %p236 = scmp.ne.s32.totalorder %s225, %s228
    %p237 = scmp.eq.s32.totalorder %s21, 1
    %p238 = por %p236, %p237
    %p239 = scmp.ne.s32.totalorder %s228, %s229
    %p240 = scmp.eq.s32.totalorder %s21, 0
    %p241 = por %p239, %p240
    %p242 = scmp.ne.s32.totalorder %s228, %s229
    %p243 = scmp.eq.s32.totalorder %s22, 1
    %p244 = por %p242, %p243
    %p246 = scmp.ne.s32.totalorder %s229, %s245
    %p247 = scmp.eq.s32.totalorder %s22, 0
    %p248 = por %p246, %p247
    %p249 = scmp.le.s32.totalorder 1, %s16
    %p250 = scmp.lt.s32.totalorder %s16, 3
    %p251 = pnand %p249, %p250
    %p252 = pneg %p251
    // Predicated region
    $region9: #{tpu_custom_call.1} parent=5 // pred_check
      _
    $region10: #{tpu_custom_call.1} parent=5 // pred_check_branch
      %254 = sbr.rel (%p251) target = $region12
    $region11: #{tpu_custom_call.1} parent=5 // pred_region
      %s255 = ssub.s32 %s16, 1
      // Predicated region
      $region13: #{tpu_custom_call.1} parent=11 // pred_check
        %p256 = pneg %p89
      $region14: #{tpu_custom_call.1} parent=11 // pred_check_branch
        %258 = sbr.rel (%p256) target = $region16
      $region15: #{tpu_custom_call.1} parent=11 // pred_region
        _
      $region16: #{tpu_custom_call.1} parent=11 // pred_fallthru
        _
      // Predicated region
      $region17: #{tpu_custom_call.1} parent=11 // pred_check
        %p259 = pneg %p110
      $region18: #{tpu_custom_call.1} parent=11 // pred_check_branch
        %261 = sbr.rel (%p259) target = $region20
      $region19: #{tpu_custom_call.1} parent=11 // pred_region
        _
      $region20: #{tpu_custom_call.1} parent=11 // pred_fallthru
        _
      // Predicated region
      $region21: #{tpu_custom_call.1} parent=11 // pred_check
        %p262 = pneg %p131
      $region22: #{tpu_custom_call.1} parent=11 // pred_check_branch
        %264 = sbr.rel (%p262) target = $region24
      $region23: #{tpu_custom_call.1} parent=11 // pred_region
        _
      $region24: #{tpu_custom_call.1} parent=11 // pred_fallthru
        _
      // Predicated region
      $region25: #{tpu_custom_call.1} parent=11 // pred_check
        %p265 = pneg %p152
      $region26: #{tpu_custom_call.1} parent=11 // pred_check_branch
        %267 = sbr.rel (%p265) target = $region28
      $region27: #{tpu_custom_call.1} parent=11 // pred_region
        _
      $region28: #{tpu_custom_call.1} parent=11 // pred_fallthru
        _
      // Predicated region
      $region29: #{tpu_custom_call.1} parent=11 // pred_check
        %p268 = pneg %p173
      $region30: #{tpu_custom_call.1} parent=11 // pred_check_branch
        %270 = sbr.rel (%p268) target = $region32
      $region31: #{tpu_custom_call.1} parent=11 // pred_region
        _
      $region32: #{tpu_custom_call.1} parent=11 // pred_fallthru
        _
      // Predicated region
      $region33: #{tpu_custom_call.1} parent=11 // pred_check
        %p271 = pneg %p194
      $region34: #{tpu_custom_call.1} parent=11 // pred_check_branch
        %273 = sbr.rel (%p271) target = $region36
      $region35: #{tpu_custom_call.1} parent=11 // pred_region
        _
      $region36: #{tpu_custom_call.1} parent=11 // pred_fallthru
        _
      // Predicated region
      $region37: #{tpu_custom_call.1} parent=11 // pred_check
        %p274 = pneg %p215
      $region38: #{tpu_custom_call.1} parent=11 // pred_check_branch
        %276 = sbr.rel (%p274) target = $region40
      $region39: #{tpu_custom_call.1} parent=11 // pred_region
        _
      $region40: #{tpu_custom_call.1} parent=11 // pred_fallthru
        _
    $region12: #{tpu_custom_call.1} parent=5 // pred_fallthru
      _
    %p277 = scmp.lt.s32.totalorder %s16, 2
    // Predicated region
    $region41: #{tpu_custom_call.1} parent=5 // pred_check
      %p278 = pneg %p277
    $region42: #{tpu_custom_call.1} parent=5 // pred_check_branch
      %280 = sbr.rel (%p278) target = $region44
    $region43: #{tpu_custom_call.1} parent=5 // pred_region
      // Predicated region
      $region45: #{tpu_custom_call.1} parent=43 // pred_check
        %p281 = pneg %p36
      $region46: #{tpu_custom_call.1} parent=43 // pred_check_branch
        %283 = sbr.rel (%p281) target = $region48
      $region47: #{tpu_custom_call.1} parent=43 // pred_region
        %s284 = smul.u32 16, %s16
        %p285 = scmp.lt.s32.totalorder %s284, 31
        %s286 = scalar_select %p285, %s284, 31
        %s287 = smul.addr %s286, 8
        %s288 = scalar_lea.vmem %s0, %s287
        %s289 = smul.u32 16, %s16
      $region48: #{tpu_custom_call.1} parent=43 // pred_fallthru
        _
      // Predicated region
      $region49: #{tpu_custom_call.1} parent=43 // pred_check
        %p290 = pneg %p62
      $region50: #{tpu_custom_call.1} parent=43 // pred_check_branch
        %292 = sbr.rel (%p290) target = $region52
      $region51: #{tpu_custom_call.1} parent=43 // pred_region
        %s293 = smul.u32 16, %s16
        %p294 = scmp.lt.s32.totalorder %s293, 31
        %s295 = scalar_select %p294, %s293, 31
        %s296 = smul.addr %s295, 8
        %s297 = scalar_lea.vmem %s1, %s296
        %s298 = smul.u32 16, %s16
      $region52: #{tpu_custom_call.1} parent=43 // pred_fallthru
        _
    $region44: #{tpu_custom_call.1} parent=5 // pred_fallthru
      _
    %p299 = scmp.le.s32.totalorder 1, %s16
    %p300 = scmp.lt.s32.totalorder %s16, 3
    %p301 = pnand %p299, %p300
    %p302 = pneg %p301
    // Predicated region
    $region53: #{tpu_custom_call.1} parent=5 // pred_check
      _
    $region54: #{tpu_custom_call.1} parent=5 // pred_check_branch
      %304 = sbr.rel (%p301) target = $region56
    $region55: #{tpu_custom_call.1} parent=5 // pred_region
      %s305 = ssub.s32 %s16, 1
      %s306 = smul.u32 16, %s21
      %p307 = scmp.lt.s32.totalorder %s306, 31
      %s308 = scalar_select %p307, %s306, 31
      %s309 = smul.addr %s308, 8
      %s310 = scalar_lea.vmem %s0, %s309
      %p311 = pneg %p42
      %p312 = pneg %p39
      %s313 = smul.u32 16, %s21
      %p314 = scmp.lt.s32.totalorder %s313, 31
      %s315 = scalar_select %p314, %s313, 31
      %s316 = smul.addr %s315, 8
      %s317 = scalar_lea.vmem %s1, %s316
      %p318 = pneg %p68
      %p319 = pneg %p65
      %p320 = pneg %p89
      %p321 = pneg %p86
      %p322 = pneg %p110
      %p323 = pneg %p107
      %p324 = pneg %p131
      %p325 = pneg %p128
      %p326 = pneg %p152
      %p327 = pneg %p149
      %p328 = pneg %p173
      %p329 = pneg %p170
      %p330 = pneg %p194
      %p331 = pneg %p191
      %p332 = pneg %p215
      %p333 = pneg %p212
      %p334 = pneg %p241
      %p335 = pneg %p238
      %s336 = smul.u32 16, %s21
      %p337 = scmp.lt.s32.totalorder %s336, 31
      %s338 = scalar_select %p337, %s336, 31
      %s339 = smul.addr %s338, 8
      %s340 = scalar_lea.vmem %s9, %s339
      %s341 = smul.u32 16, %s21
      %p342 = scmp.lt.s32.totalorder %s341, 31
      %s343 = scalar_select %p342, %s341, 31
      %s344 = smul.addr %s343, 8
      %s345 = scalar_lea.vmem %s0, %s344
      %s346 = smul.u32 16, %s21
      %s347 = smul.u32 16, %s21
      %p348 = scmp.lt.s32.totalorder %s347, 31
      %s349 = scalar_select %p348, %s347, 31
      %s350 = smul.addr %s349, 8
      %s351 = scalar_lea.vmem %s1, %s350
      %s352 = smul.u32 16, %s21
      %s353 = smul.u32 16, %s21
      %p354 = scmp.lt.s32.totalorder %s353, 31
      %s355 = scalar_select %p354, %s353, 31
      %s356 = smul.addr %s355, 8
      %s357 = scalar_lea.vmem %s9, %s356
      %s358 = smul.u32 16, %s21
      %v359 = vld [vmem:[%s345] sm:$0xff]
      %v360 = vld [vmem:[%s345 + $0x8] sm:$0xff]
      %v361 = vld [vmem:[%s345 + $0x10] sm:$0xff]
      %v362 = vld [vmem:[%s345 + $0x18] sm:$0xff]
      %v363 = vld [vmem:[%s345 + $0x20] sm:$0xff]
      %v364 = vld [vmem:[%s345 + $0x28] sm:$0xff]
      %v365 = vld [vmem:[%s345 + $0x30] sm:$0xff]
      %v366 = vld [vmem:[%s345 + $0x38] sm:$0xff]
      %v367 = vld [vmem:[%s345 + $0x40] sm:$0xff]
      %v368 = vld [vmem:[%s345 + $0x48] sm:$0xff]
      %v369 = vld [vmem:[%s345 + $0x50] sm:$0xff]
      %v370 = vld [vmem:[%s345 + $0x58] sm:$0xff]
      %v371 = vld [vmem:[%s345 + $0x60] sm:$0xff]
      %v372 = vld [vmem:[%s345 + $0x68] sm:$0xff]
      %v373 = vld [vmem:[%s345 + $0x70] sm:$0xff]
      %v374 = vld [vmem:[%s345 + $0x78] sm:$0xff]
      %v375 = vld [vmem:[%s351] sm:$0xff]
      %v376 = vld [vmem:[%s351 + $0x8] sm:$0xff]
      %v377 = vld [vmem:[%s351 + $0x10] sm:$0xff]
      %v378 = vld [vmem:[%s351 + $0x18] sm:$0xff]
      %v379 = vld [vmem:[%s351 + $0x20] sm:$0xff]
      %v380 = vld [vmem:[%s351 + $0x28] sm:$0xff]
      %v381 = vld [vmem:[%s351 + $0x30] sm:$0xff]
      %v382 = vld [vmem:[%s351 + $0x38] sm:$0xff]
      %v383 = vld [vmem:[%s351 + $0x40] sm:$0xff]
      %v384 = vld [vmem:[%s351 + $0x48] sm:$0xff]
      %v385 = vld [vmem:[%s351 + $0x50] sm:$0xff]
      %v386 = vld [vmem:[%s351 + $0x58] sm:$0xff]
      %v387 = vld [vmem:[%s351 + $0x60] sm:$0xff]
      %v388 = vld [vmem:[%s351 + $0x68] sm:$0xff]
      %v389 = vld [vmem:[%s351 + $0x70] sm:$0xff]
      %v390 = vld [vmem:[%s351 + $0x78] sm:$0xff]
      %v391 = vld [vmem:[%s2] sm:$0xff]
      %v392 = vld [vmem:[%s2 + $0x8] sm:$0xff]
      %v393 = vld [vmem:[%s2 + $0x10] sm:$0xff]
      %v394 = vld [vmem:[%s3] sm:$0xff]
      %vm395 = vcmask 64512
      %v397 = vsel %vm395, %v375, 0
      %v400 = vsel %vm395, %v376, 0
      %v403 = vsel %vm395, %v377, 0
      %v406 = vsel %vm395, %v378, 0
      %v409 = vsel %vm395, %v379, 0
      %v412 = vsel %vm395, %v380, 0
      %v415 = vsel %vm395, %v381, 0
      %v418 = vsel %vm395, %v382, 0
      %v421 = vsel %vm395, %v383, 0
      %v424 = vsel %vm395, %v384, 0
      %v427 = vsel %vm395, %v385, 0
      %v430 = vsel %vm395, %v386, 0
      %v433 = vsel %vm395, %v387, 0
      %v436 = vsel %vm395, %v388, 0
      %v439 = vsel %vm395, %v389, 0
      %v442 = vsel %vm395, %v390, 0
      %444 = vmatprep.subr.mxu0 0.0
      %445 = vmatpush1.msra.mxu0 %v394
      %446 = vmatprep.subr.mxu0 0.0
      %447 = vmatpush1.msra.mxu0 0.0
      %448 = vmatprep.subr.mxu0 0.0
      %449 = vmatpush1.msra.mxu0 0.0
      %450 = vmatprep.subr.mxu0 0.0
      %451 = vmatpush1.msra.mxu0 0.0
      %452 = vmatprep.subr.mxu0 0.0
      %453 = vmatpush1.msra.mxu0 0.0
      %454 = vmatprep.subr.mxu0 0.0
      %455 = vmatpush1.msra.mxu0 0.0
      %456 = vmatprep.subr.mxu0 0.0
      %457 = vmatpush1.msra.mxu0 0.0
      %458 = vmatprep.subr.mxu0 0.0
      %459 = vmatpush1.msra.mxu0 0.0
      %460 = vmatprep.subr.mxu0 0.0
      %461 = vmatpush1.msra.mxu0 0.0
      %462 = vmatprep.subr.mxu0 0.0
      %463 = vmatpush1.msra.mxu0 0.0
      %464 = vmatprep.subr.mxu0 0.0
      %465 = vmatpush1.msra.mxu0 0.0
      %466 = vmatprep.subr.mxu0 0.0
      %467 = vmatpush1.msra.mxu0 0.0
      %468 = vmatprep.subr.mxu0 0.0
      %469 = vmatpush1.msra.mxu0 0.0
      %470 = vmatprep.subr.mxu0 0.0
      %471 = vmatpush1.msra.mxu0 0.0
      %472 = vmatprep.subr.mxu0 0.0
      %473 = vmatpush1.msra.mxu0 0.0
      %474 = vmatprep.subr.mxu0 0.0
      %475 = vmatpush1.msra.mxu0 0.0
      %476 = vmatprep.subr.mxu0 0.0
      %477 = vmatpush1.msra.mxu0 0.0
      %478 = vmatprep.subr.mxu0 0.0
      %479 = vmatpush1.msra.mxu0 0.0
      %480 = vmatprep.subr.mxu0 0.0
      %481 = vmatpush1.msra.mxu0 0.0
      %482 = vmatprep.subr.mxu0 0.0
      %483 = vmatpush1.msra.mxu0 0.0
      %484 = vmatprep.subr.mxu0 0.0
      %485 = vmatpush1.msra.mxu0 0.0
      %486 = vmatprep.subr.mxu0 0.0
      %487 = vmatpush1.msra.mxu0 0.0
      %488 = vmatprep.subr.mxu0 0.0
      %489 = vmatpush1.msra.mxu0 0.0
      %490 = vmatprep.subr.mxu0 0.0
      %491 = vmatpush1.msra.mxu0 0.0
      %492 = vmatprep.subr.mxu0 0.0
      %493 = vmatpush1.msra.mxu0 0.0
      %494 = vmatprep.subr.mxu0 0.0
      %495 = vmatpush1.msra.mxu0 0.0
      %496 = vmatprep.subr.mxu0 0.0
      %497 = vmatpush1.msra.mxu0 0.0
      %498 = vmatprep.subr.mxu0 0.0
      %499 = vmatpush1.msra.mxu0 0.0
      %500 = vmatprep.subr.mxu0 0.0
      %501 = vmatpush1.msra.mxu0 0.0
      %502 = vmatprep.subr.mxu0 0.0
      %503 = vmatpush1.msra.mxu0 0.0
      %504 = vmatprep.subr.mxu0 0.0
      %505 = vmatpush1.msra.mxu0 0.0
      %506 = vmatprep.subr.mxu0 0.0
      %507 = vmatpush1.msra.mxu0 0.0
      %508 = vmatprep.mubr.f32.mxu0 0.0
      %509 = vmatmul.mubr.f32.gmra.mrb[0].mxu0 %v397
      %v510 = vpop.f32.mrb[0].mxu0
      %v511 = vadd.f32 0.0, %v510
      %v512 = vpop.f32.mrb[0].mxu0
      %513 = vmatprep.mubr.f32.mxu0 0.0
      %514 = vmatmul.mubr.f32.gmra.mrb[0].mxu0 %v400
      %v515 = vpop.f32.mrb[0].mxu0
      %v516 = vadd.f32 0.0, %v515
      %v517 = vpop.f32.mrb[0].mxu0
      %518 = vmatprep.mubr.f32.mxu0 0.0
      %519 = vmatmul.mubr.f32.gmra.mrb[0].mxu0 %v403
      %v520 = vpop.f32.mrb[0].mxu0
      %v521 = vadd.f32 0.0, %v520
      %v522 = vpop.f32.mrb[0].mxu0
      %523 = vmatprep.mubr.f32.mxu0 0.0
      %524 = vmatmul.mubr.f32.gmra.mrb[0].mxu0 %v406
      %v525 = vpop.f32.mrb[0].mxu0
      %v526 = vadd.f32 0.0, %v525
      %v527 = vpop.f32.mrb[0].mxu0
      %528 = vmatprep.mubr.f32.mxu0 0.0
      %529 = vmatmul.mubr.f32.gmra.mrb[0].mxu0 %v409
      %v530 = vpop.f32.mrb[0].mxu0
      %v531 = vadd.f32 0.0, %v530
      %v532 = vpop.f32.mrb[0].mxu0
      %533 = vmatprep.mubr.f32.mxu0 0.0
      %534 = vmatmul.mubr.f32.gmra.mrb[0].mxu0 %v412
      %v535 = vpop.f32.mrb[0].mxu0
      %v536 = vadd.f32 0.0, %v535
      %v537 = vpop.f32.mrb[0].mxu0
      %538 = vmatprep.mubr.f32.mxu0 0.0
      %539 = vmatmul.mubr.f32.gmra.mrb[0].mxu0 %v415
      %v540 = vpop.f32.mrb[0].mxu0
      %v541 = vadd.f32 0.0, %v540
      %v542 = vpop.f32.mrb[0].mxu0
      %543 = vmatprep.mubr.f32.mxu0 0.0
      %544 = vmatmul.mubr.f32.gmra.mrb[0].mxu0 %v418
      %v545 = vpop.f32.mrb[0].mxu0
      %v546 = vadd.f32 0.0, %v545
      %v547 = vpop.f32.mrb[0].mxu0
      %548 = vmatprep.mubr.f32.mxu0 0.0
      %549 = vmatmul.mubr.f32.gmra.mrb[0].mxu0 %v421
      %v550 = vpop.f32.mrb[0].mxu0
      %v551 = vadd.f32 0.0, %v550
      %v552 = vpop.f32.mrb[0].mxu0
      %553 = vmatprep.mubr.f32.mxu0 0.0
      %554 = vmatmul.mubr.f32.gmra.mrb[0].mxu0 %v424
      %v555 = vpop.f32.mrb[0].mxu0
      %v556 = vadd.f32 0.0, %v555
      %v557 = vpop.f32.mrb[0].mxu0
      %558 = vmatprep.mubr.f32.mxu0 0.0
      %559 = vmatmul.mubr.f32.gmra.mrb[0].mxu0 %v427
      %v560 = vpop.f32.mrb[0].mxu0
      %v561 = vadd.f32 0.0, %v560
      %v562 = vpop.f32.mrb[0].mxu0
      %563 = vmatprep.mubr.f32.mxu0 0.0
      %564 = vmatmul.mubr.f32.gmra.mrb[0].mxu0 %v430
      %v565 = vpop.f32.mrb[0].mxu0
      %v566 = vadd.f32 0.0, %v565
      %v567 = vpop.f32.mrb[0].mxu0
      %568 = vmatprep.mubr.f32.mxu0 0.0
      %569 = vmatmul.mubr.f32.gmra.mrb[0].mxu0 %v433
      %v570 = vpop.f32.mrb[0].mxu0
      %v571 = vadd.f32 0.0, %v570
      %v572 = vpop.f32.mrb[0].mxu0
      %573 = vmatprep.mubr.f32.mxu0 0.0
      %574 = vmatmul.mubr.f32.gmra.mrb[0].mxu0 %v436
      %v575 = vpop.f32.mrb[0].mxu0
      %v576 = vadd.f32 0.0, %v575
      %v577 = vpop.f32.mrb[0].mxu0
      %578 = vmatprep.mubr.f32.mxu0 0.0
      %579 = vmatmul.mubr.f32.gmra.mrb[0].mxu0 %v439
      %v580 = vpop.f32.mrb[0].mxu0
      %v581 = vadd.f32 0.0, %v580
      %v582 = vpop.f32.mrb[0].mxu0
      %583 = vmatprep.mubr.f32.mxu0 0.0
      %584 = vmatmul.mubr.f32.gmra.mrb[0].mxu0 %v442
      %v585 = vpop.f32.mrb[0].mxu0
      %v586 = vadd.f32 0.0, %v585
      %v587 = vpop.f32.mrb[0].mxu0
      %588 = vdwg.mxu0
      %vm589 = vcmask 195584
      %v591 = vsel %vm589, %v359, 0
      %v594 = vsel %vm589, %v360, 0
      %v597 = vsel %vm589, %v361, 0
      %v600 = vsel %vm589, %v362, 0
      %v603 = vsel %vm589, %v363, 0
      %v606 = vsel %vm589, %v364, 0
      %v609 = vsel %vm589, %v365, 0
      %v612 = vsel %vm589, %v366, 0
      %v615 = vsel %vm589, %v367, 0
      %v618 = vsel %vm589, %v368, 0
      %v621 = vsel %vm589, %v369, 0
      %v624 = vsel %vm589, %v370, 0
      %v627 = vsel %vm589, %v371, 0
      %v630 = vsel %vm589, %v372, 0
      %v633 = vsel %vm589, %v373, 0
      %v636 = vsel %vm589, %v374, 0
      %638 = vmatprep.subr.mxu0 0.0
      %639 = vmatpush1.msra.mxu0 %v391
      %640 = vmatprep.subr.mxu0 0.0
      %641 = vmatpush1.msra.mxu0 %v392
      %642 = vmatprep.subr.mxu0 0.0
      %643 = vmatpush1.msra.mxu0 %v393
      %644 = vmatprep.subr.mxu0 0.0
      %645 = vmatpush1.msra.mxu0 0.0
      %646 = vmatprep.subr.mxu0 0.0
      %647 = vmatpush1.msra.mxu0 0.0
      %648 = vmatprep.subr.mxu0 0.0
      %649 = vmatpush1.msra.mxu0 0.0
      %650 = vmatprep.subr.mxu0 0.0
      %651 = vmatpush1.msra.mxu0 0.0
      %652 = vmatprep.subr.mxu0 0.0
      %653 = vmatpush1.msra.mxu0 0.0
      %654 = vmatprep.subr.mxu0 0.0
      %655 = vmatpush1.msra.mxu0 0.0
      %656 = vmatprep.subr.mxu0 0.0
      %657 = vmatpush1.msra.mxu0 0.0
      %658 = vmatprep.subr.mxu0 0.0
      %659 = vmatpush1.msra.mxu0 0.0
      %660 = vmatprep.subr.mxu0 0.0
      %661 = vmatpush1.msra.mxu0 0.0
      %662 = vmatprep.subr.mxu0 0.0
      %663 = vmatpush1.msra.mxu0 0.0
      %664 = vmatprep.subr.mxu0 0.0
      %665 = vmatpush1.msra.mxu0 0.0
      %666 = vmatprep.subr.mxu0 0.0
      %667 = vmatpush1.msra.mxu0 0.0
      %668 = vmatprep.subr.mxu0 0.0
      %669 = vmatpush1.msra.mxu0 0.0
      %670 = vmatprep.subr.mxu0 0.0
      %671 = vmatpush1.msra.mxu0 0.0
      %672 = vmatprep.subr.mxu0 0.0
      %673 = vmatpush1.msra.mxu0 0.0
      %674 = vmatprep.subr.mxu0 0.0
      %675 = vmatpush1.msra.mxu0 0.0
      %676 = vmatprep.subr.mxu0 0.0
      %677 = vmatpush1.msra.mxu0 0.0
      %678 = vmatprep.subr.mxu0 0.0
      %679 = vmatpush1.msra.mxu0 0.0
      %680 = vmatprep.subr.mxu0 0.0
      %681 = vmatpush1.msra.mxu0 0.0
      %682 = vmatprep.subr.mxu0 0.0
      %683 = vmatpush1.msra.mxu0 0.0
      %684 = vmatprep.subr.mxu0 0.0
      %685 = vmatpush1.msra.mxu0 0.0
      %686 = vmatprep.subr.mxu0 0.0
      %687 = vmatpush1.msra.mxu0 0.0
      %688 = vmatprep.subr.mxu0 0.0
      %689 = vmatpush1.msra.mxu0 0.0
      %690 = vmatprep.subr.mxu0 0.0
      %691 = vmatpush1.msra.mxu0 0.0
      %692 = vmatprep.subr.mxu0 0.0
      %693 = vmatpush1.msra.mxu0 0.0
      %694 = vmatprep.subr.mxu0 0.0
      %695 = vmatpush1.msra.mxu0 0.0
      %696 = vmatprep.subr.mxu0 0.0
      %697 = vmatpush1.msra.mxu0 0.0
      %698 = vmatprep.subr.mxu0 0.0
      %699 = vmatpush1.msra.mxu0 0.0
      %700 = vmatprep.subr.mxu0 0.0
      %701 = vmatpush1.msra.mxu0 0.0
      %702 = vmatprep.mubr.f32.mxu0 0.0
      %703 = vmatmul.mubr.f32.gmra.mrb[0].mxu0 %v591
      %v704 = vpop.f32.mrb[0].mxu0
      %v705 = vadd.f32 %v511, %v704
      %v706 = vpop.f32.mrb[0].mxu0
      %707 = vmatprep.mubr.f32.mxu0 0.0
      %708 = vmatmul.mubr.f32.gmra.mrb[0].mxu0 %v594
      %v709 = vpop.f32.mrb[0].mxu0
      %v710 = vadd.f32 %v516, %v709
      %v711 = vpop.f32.mrb[0].mxu0
      %712 = vmatprep.mubr.f32.mxu0 0.0
      %713 = vmatmul.mubr.f32.gmra.mrb[0].mxu0 %v597
      %v714 = vpop.f32.mrb[0].mxu0
      %v715 = vadd.f32 %v521, %v714
      %v716 = vpop.f32.mrb[0].mxu0
      %717 = vmatprep.mubr.f32.mxu0 0.0
      %718 = vmatmul.mubr.f32.gmra.mrb[0].mxu0 %v600
      %v719 = vpop.f32.mrb[0].mxu0
      %v720 = vadd.f32 %v526, %v719
      %v721 = vpop.f32.mrb[0].mxu0
      %722 = vmatprep.mubr.f32.mxu0 0.0
      %723 = vmatmul.mubr.f32.gmra.mrb[0].mxu0 %v603
      %v724 = vpop.f32.mrb[0].mxu0
      %v725 = vadd.f32 %v531, %v724
      %v726 = vpop.f32.mrb[0].mxu0
      %727 = vmatprep.mubr.f32.mxu0 0.0
      %728 = vmatmul.mubr.f32.gmra.mrb[0].mxu0 %v606
      %v729 = vpop.f32.mrb[0].mxu0
      %v730 = vadd.f32 %v536, %v729
      %v731 = vpop.f32.mrb[0].mxu0
      %732 = vmatprep.mubr.f32.mxu0 0.0
      %733 = vmatmul.mubr.f32.gmra.mrb[0].mxu0 %v609
      %v734 = vpop.f32.mrb[0].mxu0
      %v735 = vadd.f32 %v541, %v734
      %v736 = vpop.f32.mrb[0].mxu0
      %737 = vmatprep.mubr.f32.mxu0 0.0
      %738 = vmatmul.mubr.f32.gmra.mrb[0].mxu0 %v612
      %v739 = vpop.f32.mrb[0].mxu0
      %v740 = vadd.f32 %v546, %v739
      %v741 = vpop.f32.mrb[0].mxu0
      %742 = vmatprep.mubr.f32.mxu0 0.0
      %743 = vmatmul.mubr.f32.gmra.mrb[0].mxu0 %v615
      %v744 = vpop.f32.mrb[0].mxu0
      %v745 = vadd.f32 %v551, %v744
      %v746 = vpop.f32.mrb[0].mxu0
      %747 = vmatprep.mubr.f32.mxu0 0.0
      %748 = vmatmul.mubr.f32.gmra.mrb[0].mxu0 %v618
      %v749 = vpop.f32.mrb[0].mxu0
      %v750 = vadd.f32 %v556, %v749
      %v751 = vpop.f32.mrb[0].mxu0
      %752 = vmatprep.mubr.f32.mxu0 0.0
      %753 = vmatmul.mubr.f32.gmra.mrb[0].mxu0 %v621
      %v754 = vpop.f32.mrb[0].mxu0
      %v755 = vadd.f32 %v561, %v754
      %v756 = vpop.f32.mrb[0].mxu0
      %757 = vmatprep.mubr.f32.mxu0 0.0
      %758 = vmatmul.mubr.f32.gmra.mrb[0].mxu0 %v624
      %v759 = vpop.f32.mrb[0].mxu0
      %v760 = vadd.f32 %v566, %v759
      %v761 = vpop.f32.mrb[0].mxu0
      %762 = vmatprep.mubr.f32.mxu0 0.0
      %763 = vmatmul.mubr.f32.gmra.mrb[0].mxu0 %v627
      %v764 = vpop.f32.mrb[0].mxu0
      %v765 = vadd.f32 %v571, %v764
      %v766 = vpop.f32.mrb[0].mxu0
      %767 = vmatprep.mubr.f32.mxu0 0.0
      %768 = vmatmul.mubr.f32.gmra.mrb[0].mxu0 %v630
      %v769 = vpop.f32.mrb[0].mxu0
      %v770 = vadd.f32 %v576, %v769
      %v771 = vpop.f32.mrb[0].mxu0
      %772 = vmatprep.mubr.f32.mxu0 0.0
      %773 = vmatmul.mubr.f32.gmra.mrb[0].mxu0 %v633
      %v774 = vpop.f32.mrb[0].mxu0
      %v775 = vadd.f32 %v581, %v774
      %v776 = vpop.f32.mrb[0].mxu0
      %777 = vmatprep.mubr.f32.mxu0 0.0
      %778 = vmatmul.mubr.f32.gmra.mrb[0].mxu0 %v636
      %v779 = vpop.f32.mrb[0].mxu0
      %v780 = vadd.f32 %v586, %v779
      %v781 = vpop.f32.mrb[0].mxu0
      %782 = vdwg.mxu0
      %v783 = vld [vmem:[%s4] sm:$0x1]
      %v785 = vlaneseq
      %v786 = vshrl.u32 %v785, 7
      %v787 = vsub.s32 0, %v786
      %v788 = vrot.slane %v783, %v787
      %v790 = vadd.f32 %v705, %v788
      %v791 = vadd.f32 %v710, %v788
      %v792 = vadd.f32 %v715, %v788
      %v793 = vadd.f32 %v720, %v788
      %v794 = vadd.f32 %v725, %v788
      %v795 = vadd.f32 %v730, %v788
      %v796 = vadd.f32 %v735, %v788
      %v797 = vadd.f32 %v740, %v788
      %v798 = vadd.f32 %v745, %v788
      %v799 = vadd.f32 %v750, %v788
      %v800 = vadd.f32 %v755, %v788
      %v801 = vadd.f32 %v760, %v788
      %v802 = vadd.f32 %v765, %v788
      %v803 = vadd.f32 %v770, %v788
      %v804 = vadd.f32 %v775, %v788
      %v805 = vadd.f32 %v780, %v788
      %v806 = vmul.f32 %v790, 0.01
      %v807 = vmul.f32 %v791, 0.01
      %v808 = vmul.f32 %v792, 0.01
      %v809 = vmul.f32 %v793, 0.01
      %v810 = vmul.f32 %v794, 0.01
      %v811 = vmul.f32 %v795, 0.01
      %v812 = vmul.f32 %v796, 0.01
      %v813 = vmul.f32 %v797, 0.01
      %v814 = vmul.f32 %v798, 0.01
      %v815 = vmul.f32 %v799, 0.01
      %v816 = vmul.f32 %v800, 0.01
      %v817 = vmul.f32 %v801, 0.01
      %v818 = vmul.f32 %v802, 0.01
      %v819 = vmul.f32 %v803, 0.01
      %v820 = vmul.f32 %v804, 0.01
      %v821 = vmul.f32 %v805, 0.01
      %v822 = vmax.f32 %v790, %v806
      %v823 = vmax.f32 %v791, %v807
      %v824 = vmax.f32 %v792, %v808
      %v825 = vmax.f32 %v793, %v809
      %v826 = vmax.f32 %v794, %v810
      %v827 = vmax.f32 %v795, %v811
      %v828 = vmax.f32 %v796, %v812
      %v829 = vmax.f32 %v797, %v813
      %v830 = vmax.f32 %v798, %v814
      %v831 = vmax.f32 %v799, %v815
      %v832 = vmax.f32 %v800, %v816
      %v833 = vmax.f32 %v801, %v817
      %v834 = vmax.f32 %v802, %v818
      %v835 = vmax.f32 %v803, %v819
      %v836 = vmax.f32 %v804, %v820
      %v837 = vmax.f32 %v805, %v821
      %v838 = vld [vmem:[%s5] sm:$0xff]
      %v839 = vld [vmem:[%s5 + $0x8] sm:$0xff]
      %v840 = vld [vmem:[%s5 + $0x10] sm:$0xff]
      %v841 = vld [vmem:[%s5 + $0x18] sm:$0xff]
      %v842 = vld [vmem:[%s6] sm:$0x1]
      %v844 = vlaneseq
      %v845 = vshrl.u32 %v844, 7
      %v846 = vsub.s32 0, %v845
      %v847 = vrot.slane %v842, %v846
      %vm849 = vcmask 261120
      %v851 = vsel %vm849, %v822, 0
      %v854 = vsel %vm849, %v823, 0
      %v857 = vsel %vm849, %v824, 0
      %v860 = vsel %vm849, %v825, 0
      %v863 = vsel %vm849, %v826, 0
      %v866 = vsel %vm849, %v827, 0
      %v869 = vsel %vm849, %v828, 0
      %v872 = vsel %vm849, %v829, 0
      %v875 = vsel %vm849, %v830, 0
      %v878 = vsel %vm849, %v831, 0
      %v881 = vsel %vm849, %v832, 0
      %v884 = vsel %vm849, %v833, 0
      %v887 = vsel %vm849, %v834, 0
      %v890 = vsel %vm849, %v835, 0
      %v893 = vsel %vm849, %v836, 0
      %v896 = vsel %vm849, %v837, 0
      %898 = vmatprep.subr.mxu0 0.0
      %899 = vmatpush1.msra.mxu0 %v838
      %900 = vmatprep.subr.mxu0 0.0
      %901 = vmatpush1.msra.mxu0 %v839
      %902 = vmatprep.subr.mxu0 0.0
      %903 = vmatpush1.msra.mxu0 %v840
      %904 = vmatprep.subr.mxu0 0.0
      %905 = vmatpush1.msra.mxu0 %v841
      %906 = vmatprep.subr.mxu0 0.0
      %907 = vmatpush1.msra.mxu0 0.0
      %908 = vmatprep.subr.mxu0 0.0
      %909 = vmatpush1.msra.mxu0 0.0
      %910 = vmatprep.subr.mxu0 0.0
      %911 = vmatpush1.msra.mxu0 0.0
      %912 = vmatprep.subr.mxu0 0.0
      %913 = vmatpush1.msra.mxu0 0.0
      %914 = vmatprep.subr.mxu0 0.0
      %915 = vmatpush1.msra.mxu0 0.0
      %916 = vmatprep.subr.mxu0 0.0
      %917 = vmatpush1.msra.mxu0 0.0
      %918 = vmatprep.subr.mxu0 0.0
      %919 = vmatpush1.msra.mxu0 0.0
      %920 = vmatprep.subr.mxu0 0.0
      %921 = vmatpush1.msra.mxu0 0.0
      %922 = vmatprep.subr.mxu0 0.0
      %923 = vmatpush1.msra.mxu0 0.0
      %924 = vmatprep.subr.mxu0 0.0
      %925 = vmatpush1.msra.mxu0 0.0
      %926 = vmatprep.subr.mxu0 0.0
      %927 = vmatpush1.msra.mxu0 0.0
      %928 = vmatprep.subr.mxu0 0.0
      %929 = vmatpush1.msra.mxu0 0.0
      %930 = vmatprep.subr.mxu0 0.0
      %931 = vmatpush1.msra.mxu0 0.0
      %932 = vmatprep.subr.mxu0 0.0
      %933 = vmatpush1.msra.mxu0 0.0
      %934 = vmatprep.subr.mxu0 0.0
      %935 = vmatpush1.msra.mxu0 0.0
      %936 = vmatprep.subr.mxu0 0.0
      %937 = vmatpush1.msra.mxu0 0.0
      %938 = vmatprep.subr.mxu0 0.0
      %939 = vmatpush1.msra.mxu0 0.0
      %940 = vmatprep.subr.mxu0 0.0
      %941 = vmatpush1.msra.mxu0 0.0
      %942 = vmatprep.subr.mxu0 0.0
      %943 = vmatpush1.msra.mxu0 0.0
      %944 = vmatprep.subr.mxu0 0.0
      %945 = vmatpush1.msra.mxu0 0.0
      %946 = vmatprep.subr.mxu0 0.0
      %947 = vmatpush1.msra.mxu0 0.0
      %948 = vmatprep.subr.mxu0 0.0
      %949 = vmatpush1.msra.mxu0 0.0
      %950 = vmatprep.subr.mxu0 0.0
      %951 = vmatpush1.msra.mxu0 0.0
      %952 = vmatprep.subr.mxu0 0.0
      %953 = vmatpush1.msra.mxu0 0.0
      %954 = vmatprep.subr.mxu0 0.0
      %955 = vmatpush1.msra.mxu0 0.0
      %956 = vmatprep.subr.mxu0 0.0
      %957 = vmatpush1.msra.mxu0 0.0
      %958 = vmatprep.subr.mxu0 0.0
      %959 = vmatpush1.msra.mxu0 0.0
      %960 = vmatprep.subr.mxu0 0.0
      %961 = vmatpush1.msra.mxu0 0.0
      %962 = vmatprep.mubr.f32.mxu0 0.0
      %963 = vmatmul.mubr.f32.gmra.mrb[0].mxu0 %v851
      %v964 = vpop.f32.mrb[0].mxu0
      %v965 = vadd.f32 %v847, %v964
      %v966 = vpop.f32.mrb[0].mxu0
      %967 = vmatprep.mubr.f32.mxu0 0.0
      %968 = vmatmul.mubr.f32.gmra.mrb[0].mxu0 %v854
      %v969 = vpop.f32.mrb[0].mxu0
      %v970 = vadd.f32 %v847, %v969
      %v971 = vpop.f32.mrb[0].mxu0
      %972 = vmatprep.mubr.f32.mxu0 0.0
      %973 = vmatmul.mubr.f32.gmra.mrb[0].mxu0 %v857
      %v974 = vpop.f32.mrb[0].mxu0
      %v975 = vadd.f32 %v847, %v974
      %v976 = vpop.f32.mrb[0].mxu0
      %977 = vmatprep.mubr.f32.mxu0 0.0
      %978 = vmatmul.mubr.f32.gmra.mrb[0].mxu0 %v860
      %v979 = vpop.f32.mrb[0].mxu0
      %v980 = vadd.f32 %v847, %v979
      %v981 = vpop.f32.mrb[0].mxu0
      %982 = vmatprep.mubr.f32.mxu0 0.0
      %983 = vmatmul.mubr.f32.gmra.mrb[0].mxu0 %v863
      %v984 = vpop.f32.mrb[0].mxu0
      %v985 = vadd.f32 %v847, %v984
      %v986 = vpop.f32.mrb[0].mxu0
      %987 = vmatprep.mubr.f32.mxu0 0.0
      %988 = vmatmul.mubr.f32.gmra.mrb[0].mxu0 %v866
      %v989 = vpop.f32.mrb[0].mxu0
      %v990 = vadd.f32 %v847, %v989
      %v991 = vpop.f32.mrb[0].mxu0
      %992 = vmatprep.mubr.f32.mxu0 0.0
      %993 = vmatmul.mubr.f32.gmra.mrb[0].mxu0 %v869
      %v994 = vpop.f32.mrb[0].mxu0
      %v995 = vadd.f32 %v847, %v994
      %v996 = vpop.f32.mrb[0].mxu0
      %997 = vmatprep.mubr.f32.mxu0 0.0
      %998 = vmatmul.mubr.f32.gmra.mrb[0].mxu0 %v872
      %v999 = vpop.f32.mrb[0].mxu0
      %v1000 = vadd.f32 %v847, %v999
      %v1001 = vpop.f32.mrb[0].mxu0
      %1002 = vmatprep.mubr.f32.mxu0 0.0
      %1003 = vmatmul.mubr.f32.gmra.mrb[0].mxu0 %v875
      %v1004 = vpop.f32.mrb[0].mxu0
      %v1005 = vadd.f32 %v847, %v1004
      %v1006 = vpop.f32.mrb[0].mxu0
      %1007 = vmatprep.mubr.f32.mxu0 0.0
      %1008 = vmatmul.mubr.f32.gmra.mrb[0].mxu0 %v878
      %v1009 = vpop.f32.mrb[0].mxu0
      %v1010 = vadd.f32 %v847, %v1009
      %v1011 = vpop.f32.mrb[0].mxu0
      %1012 = vmatprep.mubr.f32.mxu0 0.0
      %1013 = vmatmul.mubr.f32.gmra.mrb[0].mxu0 %v881
      %v1014 = vpop.f32.mrb[0].mxu0
      %v1015 = vadd.f32 %v847, %v1014
      %v1016 = vpop.f32.mrb[0].mxu0
      %1017 = vmatprep.mubr.f32.mxu0 0.0
      %1018 = vmatmul.mubr.f32.gmra.mrb[0].mxu0 %v884
      %v1019 = vpop.f32.mrb[0].mxu0
      %v1020 = vadd.f32 %v847, %v1019
      %v1021 = vpop.f32.mrb[0].mxu0
      %1022 = vmatprep.mubr.f32.mxu0 0.0
      %1023 = vmatmul.mubr.f32.gmra.mrb[0].mxu0 %v887
      %v1024 = vpop.f32.mrb[0].mxu0
      %v1025 = vadd.f32 %v847, %v1024
      %v1026 = vpop.f32.mrb[0].mxu0
      %1027 = vmatprep.mubr.f32.mxu0 0.0
      %1028 = vmatmul.mubr.f32.gmra.mrb[0].mxu0 %v890
      %v1029 = vpop.f32.mrb[0].mxu0
      %v1030 = vadd.f32 %v847, %v1029
      %v1031 = vpop.f32.mrb[0].mxu0
      %1032 = vmatprep.mubr.f32.mxu0 0.0
      %1033 = vmatmul.mubr.f32.gmra.mrb[0].mxu0 %v893
      %v1034 = vpop.f32.mrb[0].mxu0
      %v1035 = vadd.f32 %v847, %v1034
      %v1036 = vpop.f32.mrb[0].mxu0
      %1037 = vmatprep.mubr.f32.mxu0 0.0
      %1038 = vmatmul.mubr.f32.gmra.mrb[0].mxu0 %v896
      %v1039 = vpop.f32.mrb[0].mxu0
      %v1040 = vadd.f32 %v847, %v1039
      %v1041 = vpop.f32.mrb[0].mxu0
      %1042 = vdwg.mxu0
      %v1043 = vmul.f32 %v965, 0.01
      %v1044 = vmul.f32 %v970, 0.01
      %v1045 = vmul.f32 %v975, 0.01
      %v1046 = vmul.f32 %v980, 0.01
      %v1047 = vmul.f32 %v985, 0.01
      %v1048 = vmul.f32 %v990, 0.01
      %v1049 = vmul.f32 %v995, 0.01
      %v1050 = vmul.f32 %v1000, 0.01
      %v1051 = vmul.f32 %v1005, 0.01
      %v1052 = vmul.f32 %v1010, 0.01
      %v1053 = vmul.f32 %v1015, 0.01
      %v1054 = vmul.f32 %v1020, 0.01
      %v1055 = vmul.f32 %v1025, 0.01
      %v1056 = vmul.f32 %v1030, 0.01
      %v1057 = vmul.f32 %v1035, 0.01
      %v1058 = vmul.f32 %v1040, 0.01
      %v1059 = vmax.f32 %v965, %v1043
      %v1060 = vmax.f32 %v970, %v1044
      %v1061 = vmax.f32 %v975, %v1045
      %v1062 = vmax.f32 %v980, %v1046
      %v1063 = vmax.f32 %v985, %v1047
      %v1064 = vmax.f32 %v990, %v1048
      %v1065 = vmax.f32 %v995, %v1049
      %v1066 = vmax.f32 %v1000, %v1050
      %v1067 = vmax.f32 %v1005, %v1051
      %v1068 = vmax.f32 %v1010, %v1052
      %v1069 = vmax.f32 %v1015, %v1053
      %v1070 = vmax.f32 %v1020, %v1054
      %v1071 = vmax.f32 %v1025, %v1055
      %v1072 = vmax.f32 %v1030, %v1056
      %v1073 = vmax.f32 %v1035, %v1057
      %v1074 = vmax.f32 %v1040, %v1058
      %v1075 = vld [vmem:[%s7] sm:$0x1]
      %v1077 = vlaneseq
      %v1078 = vshrl.u32 %v1077, 7
      %v1079 = vsub.s32 0, %v1078
      %v1080 = vrot.slane %v1075, %v1079
      %v1082 = vmul.f32 %v1059, %v1080
      %v1083 = vmul.f32 %v1060, %v1080
      %v1084 = vmul.f32 %v1061, %v1080
      %v1085 = vmul.f32 %v1062, %v1080
      %v1086 = vmul.f32 %v1063, %v1080
      %v1087 = vmul.f32 %v1064, %v1080
      %v1088 = vmul.f32 %v1065, %v1080
      %v1089 = vmul.f32 %v1066, %v1080
      %v1090 = vmul.f32 %v1067, %v1080
      %v1091 = vmul.f32 %v1068, %v1080
      %v1092 = vmul.f32 %v1069, %v1080
      %v1093 = vmul.f32 %v1070, %v1080
      %v1094 = vmul.f32 %v1071, %v1080
      %v1095 = vmul.f32 %v1072, %v1080
      %v1096 = vmul.f32 %v1073, %v1080
      %v1097 = vmul.f32 %v1074, %v1080
      %v1098 = vsel %vm849, %v1082, 0.0
      %1099 = vadd.xlane.f32.xlu0 %v1098
      %v1100 = vpop.xlane.xlu0 %1099
      %v1101 = vsel %vm849, %v1083, 0.0
      %1102 = vadd.xlane.f32.xlu0 %v1101
      %v1103 = vpop.xlane.xlu0 %1102
      %v1104 = vsel %vm849, %v1084, 0.0
      %1105 = vadd.xlane.f32.xlu0 %v1104
      %v1106 = vpop.xlane.xlu0 %1105
      %v1107 = vsel %vm849, %v1085, 0.0
      %1108 = vadd.xlane.f32.xlu0 %v1107
      %v1109 = vpop.xlane.xlu0 %1108
      %v1110 = vsel %vm849, %v1086, 0.0
      %1111 = vadd.xlane.f32.xlu0 %v1110
      %v1112 = vpop.xlane.xlu0 %1111
      %v1113 = vsel %vm849, %v1087, 0.0
      %1114 = vadd.xlane.f32.xlu0 %v1113
      %v1115 = vpop.xlane.xlu0 %1114
      %v1116 = vsel %vm849, %v1088, 0.0
      %1117 = vadd.xlane.f32.xlu0 %v1116
      %v1118 = vpop.xlane.xlu0 %1117
      %v1119 = vsel %vm849, %v1089, 0.0
      %1120 = vadd.xlane.f32.xlu0 %v1119
      %v1121 = vpop.xlane.xlu0 %1120
      %v1122 = vsel %vm849, %v1090, 0.0
      %1123 = vadd.xlane.f32.xlu0 %v1122
      %v1124 = vpop.xlane.xlu0 %1123
      %v1125 = vsel %vm849, %v1091, 0.0
      %1126 = vadd.xlane.f32.xlu0 %v1125
      %v1127 = vpop.xlane.xlu0 %1126
      %v1128 = vsel %vm849, %v1092, 0.0
      %1129 = vadd.xlane.f32.xlu0 %v1128
      %v1130 = vpop.xlane.xlu0 %1129
      %v1131 = vsel %vm849, %v1093, 0.0
      %1132 = vadd.xlane.f32.xlu0 %v1131
      %v1133 = vpop.xlane.xlu0 %1132
      %v1134 = vsel %vm849, %v1094, 0.0
      %1135 = vadd.xlane.f32.xlu0 %v1134
      %v1136 = vpop.xlane.xlu0 %1135
      %v1137 = vsel %vm849, %v1095, 0.0
      %1138 = vadd.xlane.f32.xlu0 %v1137
      %v1139 = vpop.xlane.xlu0 %1138
      %v1140 = vsel %vm849, %v1096, 0.0
      %1141 = vadd.xlane.f32.xlu0 %v1140
      %v1142 = vpop.xlane.xlu0 %1141
      %v1143 = vsel %vm849, %v1097, 0.0
      %1144 = vadd.xlane.f32.xlu0 %v1143
      %v1145 = vpop.xlane.xlu0 %1144
      %s1146 = sld [smem:[#allocation2]]
      %v1147 = vstv %s1146
      %v1148 = vadd.f32 %v1100, %v1147
      %v1149 = vadd.f32 %v1103, %v1147
      %v1150 = vadd.f32 %v1106, %v1147
      %v1151 = vadd.f32 %v1109, %v1147
      %v1152 = vadd.f32 %v1112, %v1147
      %v1153 = vadd.f32 %v1115, %v1147
      %v1154 = vadd.f32 %v1118, %v1147
      %v1155 = vadd.f32 %v1121, %v1147
      %v1156 = vadd.f32 %v1124, %v1147
      %v1157 = vadd.f32 %v1127, %v1147
      %v1158 = vadd.f32 %v1130, %v1147
      %v1159 = vadd.f32 %v1133, %v1147
      %v1160 = vadd.f32 %v1136, %v1147
      %v1161 = vadd.f32 %v1139, %v1147
      %v1162 = vadd.f32 %v1142, %v1147
      %v1163 = vadd.f32 %v1145, %v1147
      %v1164 = vmul.f32 %v1148, 0.01
      %v1165 = vmul.f32 %v1149, 0.01
      %v1166 = vmul.f32 %v1150, 0.01
      %v1167 = vmul.f32 %v1151, 0.01
      %v1168 = vmul.f32 %v1152, 0.01
      %v1169 = vmul.f32 %v1153, 0.01
      %v1170 = vmul.f32 %v1154, 0.01
      %v1171 = vmul.f32 %v1155, 0.01
      %v1172 = vmul.f32 %v1156, 0.01
      %v1173 = vmul.f32 %v1157, 0.01
      %v1174 = vmul.f32 %v1158, 0.01
      %v1175 = vmul.f32 %v1159, 0.01
      %v1176 = vmul.f32 %v1160, 0.01
      %v1177 = vmul.f32 %v1161, 0.01
      %v1178 = vmul.f32 %v1162, 0.01
      %v1179 = vmul.f32 %v1163, 0.01
      %v1180 = vmax.f32 %v1148, %v1164
      %v1181 = vmax.f32 %v1149, %v1165
      %v1182 = vmax.f32 %v1150, %v1166
      %v1183 = vmax.f32 %v1151, %v1167
      %v1184 = vmax.f32 %v1152, %v1168
      %v1185 = vmax.f32 %v1153, %v1169
      %v1186 = vmax.f32 %v1154, %v1170
      %v1187 = vmax.f32 %v1155, %v1171
      %v1188 = vmax.f32 %v1156, %v1172
      %v1189 = vmax.f32 %v1157, %v1173
      %v1190 = vmax.f32 %v1158, %v1174
      %v1191 = vmax.f32 %v1159, %v1175
      %v1192 = vmax.f32 %v1160, %v1176
      %v1193 = vmax.f32 %v1161, %v1177
      %v1194 = vmax.f32 %v1162, %v1178
      %v1195 = vmax.f32 %v1163, %v1179
      %vm1196 = vcmask 7168
      %1197 = vst.msk [vmem:[%s357] sm:$0xff] %vm1196, %v1180
      %1198 = vst.msk [vmem:[%s357 + $0x8] sm:$0xff] %vm1196, %v1181
      %1199 = vst.msk [vmem:[%s357 + $0x10] sm:$0xff] %vm1196, %v1182
      %1200 = vst.msk [vmem:[%s357 + $0x18] sm:$0xff] %vm1196, %v1183
      %1201 = vst.msk [vmem:[%s357 + $0x20] sm:$0xff] %vm1196, %v1184
      %1202 = vst.msk [vmem:[%s357 + $0x28] sm:$0xff] %vm1196, %v1185
      %1203 = vst.msk [vmem:[%s357 + $0x30] sm:$0xff] %vm1196, %v1186
      %1204 = vst.msk [vmem:[%s357 + $0x38] sm:$0xff] %vm1196, %v1187
      %1205 = vst.msk [vmem:[%s357 + $0x40] sm:$0xff] %vm1196, %v1188
      %1206 = vst.msk [vmem:[%s357 + $0x48] sm:$0xff] %vm1196, %v1189
      %1207 = vst.msk [vmem:[%s357 + $0x50] sm:$0xff] %vm1196, %v1190
      %1208 = vst.msk [vmem:[%s357 + $0x58] sm:$0xff] %vm1196, %v1191
      %1209 = vst.msk [vmem:[%s357 + $0x60] sm:$0xff] %vm1196, %v1192
      %1210 = vst.msk [vmem:[%s357 + $0x68] sm:$0xff] %vm1196, %v1193
      %1211 = vst.msk [vmem:[%s357 + $0x70] sm:$0xff] %vm1196, %v1194
      %1212 = vst.msk [vmem:[%s357 + $0x78] sm:$0xff] %vm1196, %v1195
      %s1213 = smul.u32 16, %s21
      %p1214 = scmp.lt.s32.totalorder %s1213, 31
      %s1215 = scalar_select %p1214, %s1213, 31
      %s1216 = smul.addr %s1215, 8
      %s1217 = scalar_lea.vmem %s9, %s1216
      // Predicated region
      $region57: #{tpu_custom_call.1} parent=55 // pred_check
        %p1218 = pneg %p238
      $region58: #{tpu_custom_call.1} parent=55 // pred_check_branch
        %1220 = sbr.rel (%p1218) target = $region60
      $region59: #{tpu_custom_call.1} parent=55 // pred_region
        %s1221 = smul.u32 16, %s21
      $region60: #{tpu_custom_call.1} parent=55 // pred_fallthru
        _
    $region56: #{tpu_custom_call.1} parent=5 // pred_fallthru
      _
    %p1222 = scmp.le.s32.totalorder 2, %s16
    // Predicated region
    $region61: #{tpu_custom_call.1} parent=5 // pred_check
      %p1223 = pneg %p1222
    $region62: #{tpu_custom_call.1} parent=5 // pred_check_branch
      %1225 = sbr.rel (%p1223) target = $region64
    $region63: #{tpu_custom_call.1} parent=5 // pred_region
      %s1226 = ssub.s32 %s16, 2
      // Predicated region
      $region65: #{tpu_custom_call.1} parent=63 // pred_check
        %p1227 = pneg %p244
      $region66: #{tpu_custom_call.1} parent=63 // pred_check_branch
        %1229 = sbr.rel (%p1227) target = $region68
      $region67: #{tpu_custom_call.1} parent=63 // pred_region
        %s1230 = smul.u32 16, %s22
        %p1231 = scmp.lt.s32.totalorder %s1230, 31
        %s1232 = scalar_select %p1231, %s1230, 31
        %s1233 = smul.addr %s1232, 8
        %s1234 = scalar_lea.vmem %s9, %s1233
      $region68: #{tpu_custom_call.1} parent=63 // pred_fallthru
        _
    $region64: #{tpu_custom_call.1} parent=5 // pred_fallthru
      _
  $region6: #{tpu_custom_call.1} parent=0 // loop_footer
    %s20 = sadd.s32 1, %s16
  $region7: #{tpu_custom_call.1} parent=0 // loop_footer_branch
    %15 = sbr.rel target = $region3
  $region8: #{tpu_custom_call.1} parent=0 // loop_exit
    _

</llo_original>
